<compile_context>
chip_gen: v5e
topology: v5e:2x2
jax: 0.10.0
libtpu: 0.0.40
codegen_flags: <defaults>
</compile_context>

<pallas_src>
import jax
import jax.numpy as jnp
from jax import lax
from jax.experimental import pallas as pl
from jax.experimental.pallas import tpu as pltpu


def _round_up(x: int, m: int) -> int:
    return ((x + m - 1) // m) * m


_BIG = 1e30


def _make_tcl_kernel(margin: float):
    margin = float(margin)

    def kernel(x_ref, t_ref, c_ref, c2_ref, absent_ref, loss_ref, prec_ref):
        tile_m = x_ref.shape[0]
        num_classes = c_ref.shape[0]

        x = x_ref[...]                                                     # (tile_m, D)
        c = c_ref[...]                                                     # (C, D)
        t = t_ref[...]                                                     # (tile_m, 1)

        # Squared distances to every center: ||x||^2 + ||c||^2 - 2 x.c -> (tile_m, C).
        # Single MXU matmul per tile; f32 accumulation (cancellation-sensitive).
        xc = lax.dot_general(x, c, (((1,), (1,)), ((), ())),
                             preferred_element_type=jnp.float32)           # (tile_m, C)
        x2 = jnp.sum(x * x, axis=1, keepdims=True)                         # (tile_m, 1)
        d2 = jnp.maximum(x2 + c2_ref[...] - 2.0 * xc, jnp.float32(1e-12))  # (tile_m, C)

        cls = lax.broadcasted_iota(jnp.int32, (tile_m, num_classes), 1)
        own = t == cls                                                     # (tile_m, C)
        valid = (t >= 0).astype(jnp.float32)                               # (tile_m, 1)

        # dist_ap^2: own-class entry; dist_an^2: min over OTHER classes present in batch.
        ap2 = jnp.sum(jnp.where(own, d2, 0.0), axis=1, keepdims=True)      # (tile_m, 1)
        an_cand = jnp.where(own, jnp.float32(_BIG), d2) + absent_ref[...]  # (tile_m, C)
        an2 = jnp.min(an_cand, axis=1, keepdims=True)                      # (tile_m, 1)

        dist_ap = jnp.sqrt(ap2)                                            # sqrt only on
        dist_an = jnp.sqrt(an2)                                            # 2*tile_m values

        hinge = jnp.maximum(dist_ap - dist_an + jnp.float32(margin),
                            jnp.float32(0.0)) * valid
        correct = (dist_an > dist_ap).astype(jnp.float32) * valid

        # Per-tile partial sums; final mean (and 1/B) happens in the wrapper.
        loss_ref[...] = jnp.sum(hinge, axis=0, keepdims=True)              # (1, 1)
        prec_ref[...] = jnp.sum(correct, axis=0, keepdims=True)            # (1, 1)

    return kernel


def _vmem_budget_bytes() -> int:
    """Per-generation VMEM budget with headroom (64 MiB fallback covers v7x)."""
    cap = 64 * 1024 * 1024
    try:
        info = pltpu.get_tpu_info()
        cap = int(getattr(info, "vmem_capacity_bytes", cap))
    except Exception:
        pass
    return max(16 * 1024 * 1024, int(cap * 3 // 4))


def _derive_tile_m(batch: int, d_model: int, num_classes: int, budget: int) -> int:
    """Largest row tile (multiple of 8, <= 2048) that keeps the kernel VMEM-resident."""
    c_pad = _round_up(num_classes, 128)
    d_pad = _round_up(d_model, 128)
    # double-buffered x rows + targets column (lane-padded) + (tile_m, C) intermediates
    per_row = 2 * d_pad * 4 + 2 * 128 * 4 + 8 * c_pad * 4
    # centers (double-buffered by default pipelining) + c2/absent rows + slack
    fixed = 2 * num_classes * d_pad * 4 + 4 * 2 * c_pad * 4 + (1 << 20)
    tile_m = (budget - fixed) // per_row
    tile_m = max(8, min(int(tile_m), 2048, _round_up(batch, 8)))
    return (tile_m // 8) * 8


def triplet_center_loss(inputs, targets, centers, margin=0.0):
    """inputs: (B, D) float, targets: (B,) int, centers: (C, D) float -> (loss, prec)."""
    batch, d_model = inputs.shape
    num_classes, d_model_c = centers.shape
    assert d_model == d_model_c

    budget = _vmem_budget_bytes()
    tile_m = _derive_tile_m(batch, d_model, num_classes, budget)
    b_pad = _round_up(batch, tile_m)
    num_tiles = b_pad // tile_m

    x = inputs.astype(jnp.float32)                       # no-op if already f32
    t = targets.astype(jnp.int32).reshape(batch, 1)
    if b_pad != batch:
        x = jnp.pad(x, ((0, b_pad - batch), (0, 0)))
        t = jnp.pad(t, ((0, b_pad - batch), (0, 0)), constant_values=-1)

    c_f32 = centers.astype(jnp.float32)

    # Hoisted per-class setup (XLA side, once, off the kernel's critical path):
    #   ||c_k||^2 as a (1, C) lane row; +BIG penalty for classes absent from the batch.
    c2 = jnp.sum(c_f32 * c_f32, axis=1).reshape(1, num_classes)
    counts = jnp.zeros((num_classes,), jnp.float32).at[targets.astype(jnp.int32)].add(1.0)
    absent = jnp.where(counts > 0.5, 0.0, jnp.float32(_BIG)).reshape(1, num_classes)

    cost = pl.CostEstimate(
        flops=int(2 * b_pad * num_classes * d_model        # x @ centers^T
                  + 4 * b_pad * d_model                    # ||x||^2 + elementwise
                  + 2 * num_classes * d_model),            # ||c_k||^2 (wrapper)
        transcendentals=int(2 * b_pad),                    # the two sqrt columns
        bytes_accessed=int(4 * (b_pad * d_model + num_classes * d_model
                                + b_pad + 2 * num_classes + 2 * num_tiles)))

    loss_part, prec_part = pl.pallas_call(
        _make_tcl_kernel(margin),
        out_shape=(jax.ShapeDtypeStruct((num_tiles, 1), jnp.float32),
                   jax.ShapeDtypeStruct((num_tiles, 1), jnp.float32)),
        grid_spec=pltpu.PrefetchScalarGridSpec(
            num_scalar_prefetch=0,
            grid=(num_tiles,),
            in_specs=[
                pl.BlockSpec((tile_m, d_model), lambda i: (i, 0)),          # row tile of x
                pl.BlockSpec((tile_m, 1), lambda i: (i, 0)),                # row tile of targets
                pl.BlockSpec((num_classes, d_model), lambda i: (0, 0)),     # centers (resident)
                pl.BlockSpec((1, num_classes), lambda i: (0, 0)),           # ||c_k||^2 row
                pl.BlockSpec((1, num_classes), lambda i: (0, 0)),           # absent-class mask
            ],
            out_specs=(
                pl.BlockSpec((1, 1), lambda i: (i, 0)),                     # per-tile loss sum
                pl.BlockSpec((1, 1), lambda i: (i, 0)),                     # per-tile prec sum
            )),
        compiler_params=pltpu.CompilerParams(
            # Each grid step writes its own output block -> fully parallel row axis
            # (v7x can shard tiles across both TensorCores).
            dimension_semantics=("parallel",),
            vmem_limit_bytes=int(budget)),
        cost_estimate=cost,
    )(x, t, c_f32, c2, absent)

    inv_b = jnp.float32(1.0 / batch)
    loss = jnp.sum(loss_part) * inv_b
    prec = jnp.sum(prec_part) * inv_b
    return loss, prec


if __name__ == "__main__":
    # Module __init__: margin=0, num_classes=2, centers = randn(num_classes, 512).
    B, D, C = 8, 512, 2
    margin = 0.0

    key = jax.random.PRNGKey(0)
    k_centers, k_inputs = jax.random.split(key)
    centers = jax.random.normal(k_centers, (C, D), dtype=jnp.float32)
    inputs = jax.random.normal(k_inputs, (B, D), dtype=jnp.float32)
    targets = jnp.array([0, 1, 0, 1, 0, 1, 0, 1], dtype=jnp.int32)

    loss, prec = triplet_center_loss(inputs, targets, centers, margin=margin)
    jax.block_until_ready((loss, prec))

    # Pure-JAX reference of the original (B, B) formulation.
    cb = centers[targets]                                      # (B, D)
    diff = inputs[:, None, :] - cb[None, :, :]                 # (B, B, D)
    dist_ref = jnp.sqrt(jnp.clip(jnp.sum(diff * diff, -1), 1e-12))
    mask_ref = targets[:, None] == targets[None, :]
    ap = jnp.max(jnp.where(mask_ref, dist_ref, -jnp.inf), axis=1)
    an = jnp.min(jnp.where(mask_ref, jnp.inf, dist_ref), axis=1)
    loss_ref = jnp.mean(jnp.maximum(ap - an + margin, 0.0))
    prec_ref = jnp.mean((an > ap).astype(jnp.float32))

    assert jnp.allclose(loss, loss_ref, rtol=1e-5, atol=1e-4), (loss, loss_ref)
    assert jnp.allclose(prec, prec_ref), (prec, prec_ref)

    print("KERNEL_OK")
</pallas_src>

<mosaic_0001>
module attributes {stable_mosaic.version = 11 : i64} {
  func.func @kernel(%arg0: i32, %arg1: memref<8x512xf32, #tpu.memory_space<vmem>>, %arg2: memref<8x1xi32, #tpu.memory_space<vmem>>, %arg3: memref<2x512xf32, #tpu.memory_space<vmem>>, %arg4: memref<1x2xf32, #tpu.memory_space<vmem>>, %arg5: memref<1x2xf32, #tpu.memory_space<vmem>>, %arg6: memref<1x1xf32, #tpu.memory_space<vmem>>, %arg7: memref<1x1xf32, #tpu.memory_space<vmem>>) attributes {dimension_semantics = [#tpu.dimension_semantics<parallel>], iteration_bounds = array<i64: 1>, scalar_prefetch = 0 : i64, scratch_operands = 0 : i64, tpu.core_type = #tpu.core_type<tc>, window_params = [{transform_indices = @transform_0, window_bounds = array<i64: 8, 512>}, {transform_indices = @transform_1, window_bounds = array<i64: 8, 1>}, {pipeline_mode = #tpu.pipeline_mode<synchronous>, transform_indices = @transform_2, window_bounds = array<i64: 2, 512>}, {pipeline_mode = #tpu.pipeline_mode<synchronous>, transform_indices = @transform_3, window_bounds = array<i64: 1, 2>}, {pipeline_mode = #tpu.pipeline_mode<synchronous>, transform_indices = @transform_4, window_bounds = array<i64: 1, 2>}, {transform_indices = @transform_5, window_bounds = array<i64: 1, 1>}, {transform_indices = @transform_6, window_bounds = array<i64: 1, 1>}]} {
    %c0 = arith.constant 0 : index
    %c0_0 = arith.constant 0 : index
    %0 = vector.load %arg1[%c0, %c0_0] : memref<8x512xf32, #tpu.memory_space<vmem>>, vector<8x512xf32>
    %c0_1 = arith.constant 0 : index
    %c0_2 = arith.constant 0 : index
    %1 = vector.load %arg3[%c0_1, %c0_2] : memref<2x512xf32, #tpu.memory_space<vmem>>, vector<2x512xf32>
    %c0_3 = arith.constant 0 : index
    %c0_4 = arith.constant 0 : index
    %2 = vector.load %arg2[%c0_3, %c0_4] : memref<8x1xi32, #tpu.memory_space<vmem>>, vector<8x1xi32>
    %cst = arith.constant dense<0.000000e+00> : vector<8x2xf32>
    %3 = tpu.matmul %0, %1, %cst {dimension_numbers = #tpu.dot_dimension_numbers<[1], [1], [0], [0], [0, 0, 1, 0], [], []>} : vector<8x512xf32>, vector<2x512xf32>, vector<8x2xf32> -> vector<8x2xf32>
    %4 = arith.mulf %0, %0 : vector<8x512xf32>
    %cst_5 = arith.constant dense<0.000000e+00> : vector<8xf32>
    %5 = vector.multi_reduction <add>, %4, %cst_5 [1] : vector<8x512xf32> to vector<8xf32>
    %6 = vector.shape_cast %5 : vector<8xf32> to vector<8x1xf32>
    %c0_6 = arith.constant 0 : index
    %c0_7 = arith.constant 0 : index
    %7 = vector.load %arg4[%c0_6, %c0_7] : memref<1x2xf32, #tpu.memory_space<vmem>>, vector<1x2xf32>
    %8 = vector.broadcast %6 : vector<8x1xf32> to vector<8x2xf32>
    %9 = vector.broadcast %7 : vector<1x2xf32> to vector<8x2xf32>
    %10 = arith.addf %8, %9 : vector<8x2xf32>
    %cst_8 = arith.constant 2.000000e+00 : f32
    %11 = vector.broadcast %cst_8 : f32 to vector<8x2xf32>
    %12 = arith.mulf %11, %3 : vector<8x2xf32>
    %13 = arith.subf %10, %12 : vector<8x2xf32>
    %cst_9 = arith.constant 9.99999996E-13 : f32
    %14 = vector.broadcast %cst_9 : f32 to vector<8x2xf32>
    %15 = arith.maximumf %13, %14 : vector<8x2xf32>
    %16 = tpu.iota {dimensions = array<i32: 1>} : vector<8x2xi32>
    %17 = vector.broadcast %2 : vector<8x1xi32> to vector<8x2xi32>
    %18 = arith.cmpi eq, %17, %16 : vector<8x2xi32>
    %c0_i32 = arith.constant 0 : i32
    %19 = vector.broadcast %c0_i32 : i32 to vector<8x1xi32>
    %20 = arith.cmpi sge, %2, %19 : vector<8x1xi32>
    %21 = arith.extui %20 : vector<8x1xi1> to vector<8x1xi32>
    %22 = arith.sitofp %21 : vector<8x1xi32> to vector<8x1xf32>
    %cst_10 = arith.constant 0.000000e+00 : f32
    %23 = vector.broadcast %cst_10 : f32 to vector<8x2xf32>
    %24 = arith.select %18, %15, %23 : vector<8x2xi1>, vector<8x2xf32>
    %cst_11 = arith.constant dense<0.000000e+00> : vector<8xf32>
    %25 = vector.multi_reduction <add>, %24, %cst_11 [1] : vector<8x2xf32> to vector<8xf32>
    %26 = vector.shape_cast %25 : vector<8xf32> to vector<8x1xf32>
    %cst_12 = arith.constant 1.000000e+30 : f32
    %27 = vector.broadcast %cst_12 : f32 to vector<8x2xf32>
    %28 = arith.select %18, %27, %15 : vector<8x2xi1>, vector<8x2xf32>
    %c0_13 = arith.constant 0 : index
    %c0_14 = arith.constant 0 : index
    %29 = vector.load %arg5[%c0_13, %c0_14] : memref<1x2xf32, #tpu.memory_space<vmem>>, vector<1x2xf32>
    %30 = vector.broadcast %29 : vector<1x2xf32> to vector<8x2xf32>
    %31 = arith.addf %28, %30 : vector<8x2xf32>
    %cst_15 = arith.constant dense<0x7F800000> : vector<8xf32>
    %32 = vector.multi_reduction <minimumf>, %31, %cst_15 [1] : vector<8x2xf32> to vector<8xf32>
    %33 = vector.shape_cast %32 : vector<8xf32> to vector<8x1xf32>
    %34 = math.sqrt %26 : vector<8x1xf32>
    %35 = math.sqrt %33 : vector<8x1xf32>
    %36 = arith.subf %34, %35 : vector<8x1xf32>
    %cst_16 = arith.constant 0.000000e+00 : f32
    %37 = vector.broadcast %cst_16 : f32 to vector<8x1xf32>
    %38 = arith.addf %36, %37 : vector<8x1xf32>
    %cst_17 = arith.constant 0.000000e+00 : f32
    %39 = vector.broadcast %cst_17 : f32 to vector<8x1xf32>
    %40 = arith.maximumf %38, %39 : vector<8x1xf32>
    %41 = arith.mulf %40, %22 : vector<8x1xf32>
    %42 = arith.cmpf ogt, %35, %34 : vector<8x1xf32>
    %43 = arith.extui %42 : vector<8x1xi1> to vector<8x1xi32>
    %44 = arith.sitofp %43 : vector<8x1xi32> to vector<8x1xf32>
    %45 = arith.mulf %44, %22 : vector<8x1xf32>
    %cst_18 = arith.constant dense<0.000000e+00> : vector<1xf32>
    %46 = vector.multi_reduction <add>, %41, %cst_18 [0] : vector<8x1xf32> to vector<1xf32>
    %47 = vector.shape_cast %46 : vector<1xf32> to vector<1x1xf32>
    %c0_19 = arith.constant 0 : index
    %c0_20 = arith.constant 0 : index
    %48 = vector.load %arg6[%c0_19, %c0_20] : memref<1x1xf32, #tpu.memory_space<vmem>>, vector<1x1xf32>
    tpu.vector_store %arg6[%c0_19, %c0_20], %47 {strides = array<i32>} : memref<1x1xf32, #tpu.memory_space<vmem>>, vector<1x1xf32>,
    %cst_21 = arith.constant dense<0.000000e+00> : vector<1xf32>
    %49 = vector.multi_reduction <add>, %45, %cst_21 [0] : vector<8x1xf32> to vector<1xf32>
    %50 = vector.shape_cast %49 : vector<1xf32> to vector<1x1xf32>
    %c0_22 = arith.constant 0 : index
    %c0_23 = arith.constant 0 : index
    %51 = vector.load %arg7[%c0_22, %c0_23] : memref<1x1xf32, #tpu.memory_space<vmem>>, vector<1x1xf32>
    tpu.vector_store %arg7[%c0_22, %c0_23], %50 {strides = array<i32>} : memref<1x1xf32, #tpu.memory_space<vmem>>, vector<1x1xf32>,
    return
  }
  func.func @transform_0(%arg0: i32) -> (i32, i32) {
    %c0_i32 = arith.constant 0 : i32
    %c0_i32_0 = arith.constant 0 : i32
    return %arg0, %c0_i32 : i32, i32
  }
  func.func @transform_1(%arg0: i32) -> (i32, i32) {
    %c0_i32 = arith.constant 0 : i32
    %c0_i32_0 = arith.constant 0 : i32
    return %arg0, %c0_i32 : i32, i32
  }
  func.func @transform_2(%arg0: i32) -> (i32, i32) {
    %c0_i32 = arith.constant 0 : i32
    %c0_i32_0 = arith.constant 0 : i32
    %c0_i32_1 = arith.constant 0 : i32
    return %c0_i32, %c0_i32_0 : i32, i32
  }
  func.func @transform_3(%arg0: i32) -> (i32, i32) {
    %c0_i32 = arith.constant 0 : i32
    %c0_i32_0 = arith.constant 0 : i32
    %c0_i32_1 = arith.constant 0 : i32
    return %c0_i32, %c0_i32_0 : i32, i32
  }
  func.func @transform_4(%arg0: i32) -> (i32, i32) {
    %c0_i32 = arith.constant 0 : i32
    %c0_i32_0 = arith.constant 0 : i32
    %c0_i32_1 = arith.constant 0 : i32
    return %c0_i32, %c0_i32_0 : i32, i32
  }
  func.func @transform_5(%arg0: i32) -> (i32, i32) {
    %c0_i32 = arith.constant 0 : i32
    %c0_i32_0 = arith.constant 0 : i32
    return %arg0, %c0_i32 : i32, i32
  }
  func.func @transform_6(%arg0: i32) -> (i32, i32) {
    %c0_i32 = arith.constant 0 : i32
    %c0_i32_0 = arith.constant 0 : i32
    return %arg0, %c0_i32 : i32, i32
  }
}

</mosaic_0001>

<llo_original>
// kernel: tpu_custom_call.1
$region0: #{tpu_custom_call.1}
  #allocation0 [shape = 'u32[]', space=smem, size = 0x4, offset = 0x4, fixed_abs, tag = 'smem constant byte address 0x4 - core index']
  #allocation1 [shape = 'u32[72,128]{1,0:T(1,128)}', space=vmem, size = 0x9000, scoped, tag = 'internal scratch']
  %s0 = inlined_call_operand.hbm [shape: f32[8,512], index: 0, kind: input, shape index: {}]
  %s1 = inlined_call_operand.vmem [shape: s32[8,1], index: 1, kind: input, shape index: {}]
  %s2 = inlined_call_operand.vmem [shape: f32[2,512], index: 2, kind: input, shape index: {}]
  %s3 = inlined_call_operand.vmem [shape: f32[1,2], index: 3, kind: input, shape index: {}]
  %s4 = inlined_call_operand.vmem [shape: f32[1,2], index: 4, kind: input, shape index: {}]
  %s5 = inlined_call_operand.hbm [shape: f32[1,1], index: 5, kind: output, shape index: {0}]
  %s6 = inlined_call_operand.hbm [shape: f32[1,1], index: 6, kind: output, shape index: {1}]
  %7 = xla_tuple %s5, %s6
  %s8 = sld [smem:[#allocation0]]
  $region42: #{tpu_custom_call.1} parent=0
    _
  %s10 = ssub.s32 1, %s8
  %s11 = scalar_select 0, %s10, %s8
  $region1: #{tpu_custom_call.1} parent=0
    #allocation2 [shape = 'u8[16384]{0}', space=vmem, size = 0x4000, scoped, tag = 'input window, operand 0, single buffered']
    #allocation3 [shape = 's32[1]{0}', space=sflag, size = 0x4, scoped, tag = 'scoped memory for tpu_custom_call.1']
    #allocation4 [shape = 's32[1]{0}', space=sflag, size = 0x4, scoped, tag = 'scoped memory for tpu_custom_call.1']
    #allocation5 [shape = 'u8[512]{0}', space=vmem, size = 0x400, scoped, tag = 'output window, operand 0, single buffered']
    #allocation6 [shape = 'u8[512]{0}', space=vmem, size = 0x400, scoped, tag = 'output window, operand 1, single buffered']
    #allocation7 [shape = 's32[1]{0}', space=sflag, size = 0x4, scoped, tag = 'scoped memory for tpu_custom_call.1']
    %12 = vsyncpa [#allocation3], 0
    %13 = vsyncpa [#allocation4], 0
    %14 = vsyncpa [#allocation7], 0
    // Predicated region
    $region2: #{tpu_custom_call.1} parent=1 // pred_check
      _
    $region3: #{tpu_custom_call.1} parent=1 // pred_check_branch
      %16 = sbr.rel (0) target = $region5
    $region4: #{tpu_custom_call.1} parent=1 // pred_region
      %18 = vsyncadd [#allocation3], 0
      %s20 = sshll.u32 %s0, 4
      %s21 = int_to_ptr.hbm [resolvable:$true] %s20
      %s22 = sshll.u32 [#allocation2], 4
      %s23 = int_to_ptr.vmem [resolvable:$true] %s22
      %25 = dma.hbm_to_vmem [thread:$0]  %s21, 512, %s23, [#allocation3]
    $region5: #{tpu_custom_call.1} parent=1 // pred_fallthru
      _
    // Predicated region
    $region6: #{tpu_custom_call.1} parent=1 // pred_check
      _
    $region7: #{tpu_custom_call.1} parent=1 // pred_check_branch
      %27 = sbr.rel (0) target = $region9
    $region8: #{tpu_custom_call.1} parent=1 // pred_region
      _
    $region9: #{tpu_custom_call.1} parent=1 // pred_fallthru
      _
    // Predicated region
    $region10: #{tpu_custom_call.1} parent=1 // pred_check
      _
    $region11: #{tpu_custom_call.1} parent=1 // pred_check_branch
      %29 = sbr.rel (0) target = $region13
    $region12: #{tpu_custom_call.1} parent=1 // pred_region
      _
    $region13: #{tpu_custom_call.1} parent=1 // pred_fallthru
      _
    // Predicated region
    $region14: #{tpu_custom_call.1} parent=1 // pred_check
      _
    $region15: #{tpu_custom_call.1} parent=1 // pred_check_branch
      %31 = sbr.rel (0) target = $region17
    $region16: #{tpu_custom_call.1} parent=1 // pred_region
      _
    $region17: #{tpu_custom_call.1} parent=1 // pred_fallthru
      _
    // Predicated region
    $region18: #{tpu_custom_call.1} parent=1 // pred_check
      _
    $region19: #{tpu_custom_call.1} parent=1 // pred_check_branch
      %33 = sbr.rel (0) target = $region21
    $region20: #{tpu_custom_call.1} parent=1 // pred_region
      _
    $region21: #{tpu_custom_call.1} parent=1 // pred_fallthru
      _
    // Predicated region
    $region22: #{tpu_custom_call.1} parent=1 // pred_check
      _
    $region23: #{tpu_custom_call.1} parent=1 // pred_check_branch
      %35 = sbr.rel (0) target = $region25
    $region24: #{tpu_custom_call.1} parent=1 // pred_region
      %37 = dma.done [#allocation3], 512
    $region25: #{tpu_custom_call.1} parent=1 // pred_fallthru
      _
    %v38 = vld [vmem:[#allocation2] sm:$0xff]
    %v39 = vld [vmem:[#allocation2 + $0x8] sm:$0xff]
    %v40 = vld [vmem:[#allocation2 + $0x10] sm:$0xff]
    %v41 = vld [vmem:[#allocation2 + $0x18] sm:$0xff]
    %v42 = vld [vmem:[%s2] sm:$0xff]
    %v43 = vld [vmem:[%s1] sm:$0xff]
    %45 = vst [vmem:[#allocation1] ss:$4 sm:$0xff] %v42
    %v46 = vld.sshfl [vmem:[#allocation1] sm:$0xff pattern:$0x73625140]
    %v47 = vld.sshfl [vmem:[#allocation1 + $0x8] sm:$0xff pattern:$0x73625140]
    %v48 = vld.sshfl [vmem:[#allocation1 + $0x10] sm:$0xff pattern:$0x73625140]
    %v49 = vld.sshfl [vmem:[#allocation1 + $0x18] sm:$0xff pattern:$0x73625140]
    %54 = vmatpush.xpose.msra.mxu0 0.0
    %55 = vmatpush.xpose.msra.mxu0 0.0
    %56 = vmatpush.xpose.msra.mxu0 0.0
    %57 = vmatpush.xpose.msra.mxu0 0.0
    %58 = vmatpush.xpose.msra.mxu0 0.0
    %59 = vmatpush.xpose.msra.mxu0 0.0
    %60 = vmatpush.xpose.msra.mxu0 0.0
    %61 = vmatpush.xpose.msra.mxu0 0.0
    %62 = vmatpush.xpose.msra.mxu0 0.0
    %63 = vmatpush.xpose.msra.mxu0 0.0
    %64 = vmatpush.xpose.msra.mxu0 0.0
    %65 = vmatpush.xpose.msra.mxu0 0.0
    %66 = vmatpush.xpose.msra.mxu0 0.0
    %67 = vmatpush.xpose.msra.mxu0 0.0
    %68 = vmatpush.xpose.msra.mxu0 0.0
    %69 = vmatpush.xpose.msra.mxu0 %v46
    %70 = vmatmul.f32.gmra.mxu0 %v38
    %v71 = vpop.f32.mrf.mxu0
    %v72 = vadd.f32 0.0, %v71
    %73 = vdwg.mxu0
    %74 = vmatpush.xpose.msra.mxu0 0.0
    %75 = vmatpush.xpose.msra.mxu0 0.0
    %76 = vmatpush.xpose.msra.mxu0 0.0
    %77 = vmatpush.xpose.msra.mxu0 0.0
    %78 = vmatpush.xpose.msra.mxu0 0.0
    %79 = vmatpush.xpose.msra.mxu0 0.0
    %80 = vmatpush.xpose.msra.mxu0 0.0
    %81 = vmatpush.xpose.msra.mxu0 0.0
    %82 = vmatpush.xpose.msra.mxu0 0.0
    %83 = vmatpush.xpose.msra.mxu0 0.0
    %84 = vmatpush.xpose.msra.mxu0 0.0
    %85 = vmatpush.xpose.msra.mxu0 0.0
    %86 = vmatpush.xpose.msra.mxu0 0.0
    %87 = vmatpush.xpose.msra.mxu0 0.0
    %88 = vmatpush.xpose.msra.mxu0 0.0
    %89 = vmatpush.xpose.msra.mxu0 %v47
    %90 = vmatmul.f32.gmra.mxu0 %v39
    %v91 = vpop.f32.mrf.mxu0
    %v92 = vadd.f32 %v72, %v91
    %93 = vdwg.mxu0
    %94 = vmatpush.xpose.msra.mxu0 0.0
    %95 = vmatpush.xpose.msra.mxu0 0.0
    %96 = vmatpush.xpose.msra.mxu0 0.0
    %97 = vmatpush.xpose.msra.mxu0 0.0
    %98 = vmatpush.xpose.msra.mxu0 0.0
    %99 = vmatpush.xpose.msra.mxu0 0.0
    %100 = vmatpush.xpose.msra.mxu0 0.0
    %101 = vmatpush.xpose.msra.mxu0 0.0
    %102 = vmatpush.xpose.msra.mxu0 0.0
    %103 = vmatpush.xpose.msra.mxu0 0.0
    %104 = vmatpush.xpose.msra.mxu0 0.0
    %105 = vmatpush.xpose.msra.mxu0 0.0
    %106 = vmatpush.xpose.msra.mxu0 0.0
    %107 = vmatpush.xpose.msra.mxu0 0.0
    %108 = vmatpush.xpose.msra.mxu0 0.0
    %109 = vmatpush.xpose.msra.mxu0 %v48
    %110 = vmatmul.f32.gmra.mxu0 %v40
    %v111 = vpop.f32.mrf.mxu0
    %v112 = vadd.f32 %v92, %v111
    %113 = vdwg.mxu0
    %114 = vmatpush.xpose.msra.mxu0 0.0
    %115 = vmatpush.xpose.msra.mxu0 0.0
    %116 = vmatpush.xpose.msra.mxu0 0.0
    %117 = vmatpush.xpose.msra.mxu0 0.0
    %118 = vmatpush.xpose.msra.mxu0 0.0
    %119 = vmatpush.xpose.msra.mxu0 0.0
    %120 = vmatpush.xpose.msra.mxu0 0.0
    %121 = vmatpush.xpose.msra.mxu0 0.0
    %122 = vmatpush.xpose.msra.mxu0 0.0
    %123 = vmatpush.xpose.msra.mxu0 0.0
    %124 = vmatpush.xpose.msra.mxu0 0.0
    %125 = vmatpush.xpose.msra.mxu0 0.0
    %126 = vmatpush.xpose.msra.mxu0 0.0
    %127 = vmatpush.xpose.msra.mxu0 0.0
    %128 = vmatpush.xpose.msra.mxu0 0.0
    %129 = vmatpush.xpose.msra.mxu0 %v49
    %130 = vmatmul.f32.gmra.mxu0 %v41
    %v131 = vpop.f32.mrf.mxu0
    %v132 = vadd.f32 %v112, %v131
    %133 = vdwg.mxu0
    %v134 = vmul.f32 %v38, %v38
    %v135 = vmul.f32 %v39, %v39
    %v136 = vmul.f32 %v40, %v40
    %v137 = vmul.f32 %v41, %v41
    %v138 = vadd.f32 %v134, %v135
    %v139 = vadd.f32 %v138, %v136
    %v140 = vadd.f32 %v139, %v137
    %141 = vadd.xlane.f32.xlu0 %v140
    %v142 = vpop.xlane.xlu0 %141
    %v143 = vld [vmem:[%s3] sm:$0x1]
    %v145 = vperm.slane %v143, 0
    %v147 = vadd.f32 %v142, %v145
    %v148 = vmul.f32 %v132, 2.0
    %v149 = vsub.f32 %v147, %v148
    %v150 = vmax.f32 %v149, 1e-12
    %v151 = vlaneseq
    %v152 = vand.u32 %v151, 127
    %153 = vset.pattern.permute.xlu0 0
    %154 = vperm.xlu0 %153, %v43
    %v155 = vpop.permute.xlu0 %154
    %vm156 = vcmp.eq.s32.totalorder %v155, %v152
    %vm157 = vcmp.ge.s32.totalorder %v43, 0
    %v158 = vsel %vm157, 1, 0
    %v159 = vcvt.s32.f32 %v158
    %v160 = vsel %vm156, %v150, 0.0
    %vm161 = vcmask 15360
    %v162 = vsel %vm161, %v160, 0.0
    %163 = vadd.xlane.f32.xlu0 %v162
    %v164 = vpop.xlane.xlu0 %163
    %v165 = vsel %vm156, 1e+30, %v150
    %v166 = vld [vmem:[%s4] sm:$0x1]
    %v168 = vperm.slane %v166, 0
    %v170 = vadd.f32 %v165, %v168
    %v171 = vsel %vm161, %v170, inf
    %172 = vmin.xlane.f32.xlu0 %v171
    %v173 = vpop.xlane.xlu0 %172
    %v174 = vrsqrt.pop %v164
    %v175 = vmul.f32 %v174, %v164
    %v176 = vmul.f32 %v175, %v174
    %v177 = vmul.f32 0.5, %v176
    %v178 = vsub.f32 1.5, %v177
    %v179 = vmul.f32 %v174, %v178
    %v180 = vmul.f32 %v164, %v179
    %vm181 = vcmp.eq.f32.partialorder %v164, inf
    %v182 = vsel %vm181, %v164, %v180
    %vm183 = vcmp.eq.f32.partialorder %v164, 0.0
    %v184 = vand.u32 %v164, 2147483648
    %v185 = vsel %vm183, %v184, %v182
    %v186 = vrsqrt.pop %v173
    %v187 = vmul.f32 %v186, %v173
    %v188 = vmul.f32 %v187, %v186
    %v189 = vmul.f32 0.5, %v188
    %v190 = vsub.f32 1.5, %v189
    %v191 = vmul.f32 %v186, %v190
    %v192 = vmul.f32 %v173, %v191
    %vm193 = vcmp.eq.f32.partialorder %v173, inf
    %v194 = vsel %vm193, %v173, %v192
    %vm195 = vcmp.eq.f32.partialorder %v173, 0.0
    %v196 = vand.u32 %v173, 2147483648
    %v197 = vsel %vm195, %v196, %v194
    %v198 = vsub.f32 %v185, %v197
    %v199 = vadd.f32 %v198, 0.0
    %v200 = vmax.f32 %v199, 0.0
    %v201 = vmul.f32 %v200, %v159
    %vm202 = vcmp.gt.f32.partialorder %v197, %v185
    %v203 = vsel %vm202, 1, 0
    %v204 = vcvt.s32.f32 %v203
    %v205 = vmul.f32 %v204, %v159
    %vm206 = vcmask 7168
    %v207 = vsel %vm206, %v201, 0.0
    %v208 = vrot.slane %v207, 4
    %v209 = vadd.f32 %v207, %v208
    %v210 = vrot.slane %v209, 2
    %v211 = vadd.f32 %v209, %v210
    %v212 = vrot.slane %v211, 1
    %v213 = vadd.f32 %v211, %v212
    %vm214 = vcmask 0
    %215 = vst.msk [vmem:[#allocation5] sm:$0x1] %vm214, %v213
    %v216 = vsel %vm206, %v205, 0.0
    %v217 = vrot.slane %v216, 4
    %v218 = vadd.f32 %v216, %v217
    %v219 = vrot.slane %v218, 2
    %v220 = vadd.f32 %v218, %v219
    %v221 = vrot.slane %v220, 1
    %v222 = vadd.f32 %v220, %v221
    %223 = vst.msk [vmem:[#allocation6] sm:$0x1] %vm214, %v222
    // Predicated region
    $region26: #{tpu_custom_call.1} parent=1 // pred_check
      _
    $region27: #{tpu_custom_call.1} parent=1 // pred_check_branch
      %225 = sbr.rel (0) target = $region29
    $region28: #{tpu_custom_call.1} parent=1 // pred_region
      %227 = vsyncadd [#allocation4], 0
      %s229 = sshll.u32 [#allocation5], 4
      %s230 = int_to_ptr.vmem [resolvable:$true] %s229
      %s231 = sshll.u32 %s5, 4
      %s232 = int_to_ptr.hbm [resolvable:$true] %s231
      %234 = dma.vmem_to_hbm [thread:$0]  %s230, 16, %s232, [#allocation4]
    $region29: #{tpu_custom_call.1} parent=1 // pred_fallthru
      _
    // Predicated region
    $region30: #{tpu_custom_call.1} parent=1 // pred_check
      _
    $region31: #{tpu_custom_call.1} parent=1 // pred_check_branch
      %236 = sbr.rel (0) target = $region33
    $region32: #{tpu_custom_call.1} parent=1 // pred_region
      %238 = vsyncadd [#allocation7], 0
      %s240 = sshll.u32 [#allocation6], 4
      %s241 = int_to_ptr.vmem [resolvable:$true] %s240
      %s242 = sshll.u32 %s6, 4
      %s243 = int_to_ptr.hbm [resolvable:$true] %s242
      %245 = dma.vmem_to_hbm [thread:$0]  %s241, 16, %s243, [#allocation7]
    $region33: #{tpu_custom_call.1} parent=1 // pred_fallthru
      _
    // Predicated region
    $region34: #{tpu_custom_call.1} parent=1 // pred_check
      _
    $region35: #{tpu_custom_call.1} parent=1 // pred_check_branch
      %247 = sbr.rel (0) target = $region37
    $region36: #{tpu_custom_call.1} parent=1 // pred_region
      %249 = dma.done [#allocation4], 16
    $region37: #{tpu_custom_call.1} parent=1 // pred_fallthru
      _
    // Predicated region
    $region38: #{tpu_custom_call.1} parent=1 // pred_check
      _
    $region39: #{tpu_custom_call.1} parent=1 // pred_check_branch
      %251 = sbr.rel (0) target = $region41
    $region40: #{tpu_custom_call.1} parent=1 // pred_region
      %253 = dma.done [#allocation7], 16
    $region41: #{tpu_custom_call.1} parent=1 // pred_fallthru
      _
    %254 = vsyncpa [#allocation3], 1
    %255 = vsyncpa [#allocation4], 1
    %256 = vsyncpa [#allocation7], 1

</llo_original>
